<compile_context>
chip_gen: v6e
topology: v6e:2x2x1
jax: 0.10.0
libtpu: 0.0.40
codegen_flags: <defaults>
</compile_context>

<pallas_src>
import functools

import jax
import jax.numpy as jnp
from jax.experimental import pallas as pl
from jax.experimental.pallas import tpu as pltpu


def _round_up(x, m):
    return (x + m - 1) // m * m


def _pad2(a, rows, cols):
    r, c = a.shape
    if r == rows and c == cols:
        return a
    return jnp.pad(a, ((0, rows - r), (0, cols - c)))


def _tpu_config():
    """Per-generation tile sizes / dtypes / VMEM budgets."""
    try:
        kind = jax.devices()[0].device_kind.lower()
    except Exception:  # pragma: no cover
        kind = ""
    if "v7" in kind:
        return dict(name="v7x", tm=512, tk=1024, vmem=48 * 1024 * 1024,
                    h_dtype=jnp.bfloat16, resident_budget=24 * 1024 * 1024,
                    min_row_tiles=2)
    if "v6" in kind:
        return dict(name="v6e", tm=1024, tk=1024, vmem=100 * 1024 * 1024,
                    h_dtype=jnp.bfloat16, resident_budget=64 * 1024 * 1024,
                    min_row_tiles=1)
    if "v5" in kind and ("lite" in kind or "5e" in kind):
        return dict(name="v5e", tm=512, tk=1024, vmem=100 * 1024 * 1024,
                    h_dtype=jnp.float32, resident_budget=64 * 1024 * 1024,
                    min_row_tiles=1)
    # Unknown / older generation: conservative defaults.
    return dict(name="generic", tm=512, tk=1024, vmem=64 * 1024 * 1024,
                h_dtype=jnp.float32, resident_budget=24 * 1024 * 1024,
                min_row_tiles=1)


# ----------------------------------------------------------------------------
# Kernels
# ----------------------------------------------------------------------------
def _ffn_resident_kernel(x_ref, w1_ref, b1_ref, w2_ref, b2_ref, o_ref, *,
                         h_dtype):
    # x:(tm,dm) w1:(dm,dff) b1:(1,dff) w2:(dff,dm) b2:(1,dm) o:(tm,dm)
    h = jnp.dot(x_ref[...], w1_ref[...], preferred_element_type=h_dtype)
    h = jnp.maximum(h + b1_ref[...], 0.0)
    # dropout == identity (inference)
    y = jnp.dot(h.astype(w2_ref.dtype), w2_ref[...],
                preferred_element_type=jnp.float32)
    o_ref[...] = (y + b2_ref[...]).astype(o_ref.dtype)


def _ffn_tiled_kernel(x_ref, w1_ref, b1_ref, w2_ref, b2_ref, o_ref, acc_ref, *,
                      h_dtype):
    # x:(tm,dm) w1:(dm,tk) b1:(1,tk) w2:(tk,dm) b2:(1,dm) o:(tm,dm) acc:(tm,dm) f32
    k = pl.program_id(1)

    @pl.when(k == 0)
    def _init():
        acc_ref[...] = jnp.zeros_like(acc_ref)

    h = jnp.dot(x_ref[...], w1_ref[...], preferred_element_type=h_dtype)
    h = jnp.maximum(h + b1_ref[...], 0.0)
    # dropout == identity (inference)
    acc_ref[...] += jnp.dot(h.astype(w2_ref.dtype), w2_ref[...],
                            preferred_element_type=jnp.float32)

    @pl.when(k == pl.num_programs(1) - 1)
    def _finalize():
        o_ref[...] = (acc_ref[...] + b2_ref[...]).astype(o_ref.dtype)


# ----------------------------------------------------------------------------
# Wrapper: prepare weights once, return a jitted apply(x)
# ----------------------------------------------------------------------------
def make_ffn(w1, b1, w2, b2, *, dropout=0.0, compute_dtype=jnp.bfloat16,
             out_dtype=None, force_tiled=False):
    """w1:(d_model,d_ff) b1:(d_ff,) w2:(d_ff,d_model) b2:(d_model,). Returns apply(x)."""
    del dropout  # identity in inference; see TODO at top of file.
    cfg = _tpu_config()
    h_dtype = cfg["h_dtype"] if compute_dtype == jnp.bfloat16 else jnp.float32
    d_model, d_ff = w1.shape

    dm_p = _round_up(d_model, 128)                    # lane-dense output width
    tk = min(cfg["tk"], _round_up(d_ff, 128))         # d_ff reduction block
    dff_p = _round_up(d_ff, tk)

    cbytes = jnp.dtype(compute_dtype).itemsize

    # Weight pad + cast hoisted out of the per-call path (done exactly once).
    w1_p = _pad2(w1, dm_p, dff_p).astype(compute_dtype)
    b1_p = _pad2(b1.reshape(1, d_ff), 1, dff_p).astype(h_dtype)
    w2_p = _pad2(w2, dff_p, dm_p).astype(compute_dtype)
    b2_p = _pad2(b2.reshape(1, d_model), 1, dm_p).astype(jnp.float32)

    # "Weights fully VMEM-resident" fast path (count double-buffered copies).
    weight_bytes = 2 * (dm_p * dff_p + dff_p * dm_p) * cbytes
    resident = (not force_tiled) and weight_bytes <= cfg["resident_budget"]

    row_align = 16 if compute_dtype == jnp.bfloat16 else 8

    def forward(x, w1_p, b1_p, w2_p, b2_p):
        B, S, dm = x.shape
        assert dm == d_model
        M = B * S
        odt = out_dtype or x.dtype
        obytes = jnp.dtype(odt).itemsize
        hbytes = jnp.dtype(h_dtype).itemsize

        # Row tile: as large as the config allows (multiple of row_align);
        # ensure >= min_row_tiles tiles so both v7x TensorCores get work.
        tm_eff = min(cfg["tm"], _round_up(M, row_align))
        n_tiles = -(-M // tm_eff)
        if (cfg["min_row_tiles"] > 1 and n_tiles < cfg["min_row_tiles"]
                and M > row_align):
            tm_eff = _round_up(-(-M // cfg["min_row_tiles"]), row_align)

        if not resident:
            # Light VMEM guard for the tiled path.
            def est(tm):
                return (2 * tm * dm_p * cbytes        # x tile (double buffered)
                        + 2 * dm_p * tk * cbytes      # W1 block
                        + 2 * tk * dm_p * cbytes      # W2 block
                        + tm * dm_p * 4               # f32 accumulator scratch
                        + 2 * tm * dm_p * obytes      # out tile
                        + tm * tk * hbytes)           # h intermediate

            while est(tm_eff) > 0.85 * cfg["vmem"] and tm_eff > 2 * row_align:
                tm_eff = _round_up(tm_eff // 2, row_align)

        M_p = _round_up(M, tm_eff)
        grid_rows = M_p // tm_eff

        # Pre-cast x to the MXU dtype here (halves x DMA, removes the per-k
        # in-kernel cast); zero row/lane padding is exact for this FFN.
        x2 = _pad2(x.reshape(M, d_model).astype(compute_dtype), M_p, dm_p)

        if resident:
            grid = (grid_rows,)
            in_specs = [
                pl.BlockSpec((tm_eff, dm_p), lambda i: (i, 0)),    # x row tile
                pl.BlockSpec((dm_p, dff_p), lambda i: (0, 0)),     # W1 (resident)
                pl.BlockSpec((1, dff_p), lambda i: (0, 0)),        # b1
                pl.BlockSpec((dff_p, dm_p), lambda i: (0, 0)),     # W2 (resident)
                pl.BlockSpec((1, dm_p), lambda i: (0, 0)),         # b2
            ]
            out_specs = pl.BlockSpec((tm_eff, dm_p), lambda i: (i, 0))
            scratch = []
            semantics = ("parallel",)
            kernel = functools.partial(_ffn_resident_kernel, h_dtype=h_dtype)
        else:
            grid = (grid_rows, dff_p // tk)
            in_specs = [
                pl.BlockSpec((tm_eff, dm_p), lambda i, k: (i, 0)),  # x row tile
                pl.BlockSpec((dm_p, tk), lambda i, k: (0, k)),      # W1 d_ff block
                pl.BlockSpec((1, tk), lambda i, k: (0, k)),         # b1 d_ff block
                pl.BlockSpec((tk, dm_p), lambda i, k: (k, 0)),      # W2 d_ff block
                pl.BlockSpec((1, dm_p), lambda i, k: (0, 0)),       # b2
            ]
            out_specs = pl.BlockSpec((tm_eff, dm_p), lambda i, k: (i, 0))
            scratch = [pltpu.VMEM((tm_eff, dm_p), jnp.float32)]
            semantics = ("parallel", "arbitrary")
            kernel = functools.partial(_ffn_tiled_kernel, h_dtype=h_dtype)

        out = pl.pallas_call(
            kernel,
            out_shape=jax.ShapeDtypeStruct((M_p, dm_p), odt),
            grid_spec=pltpu.PrefetchScalarGridSpec(
                num_scalar_prefetch=0,
                grid=grid,
                in_specs=in_specs,
                out_specs=out_specs,
                scratch_shapes=scratch,
            ),
            compiler_params=pltpu.CompilerParams(
                dimension_semantics=semantics,
                vmem_limit_bytes=cfg["vmem"],
            ),
        )(x2, w1_p, b1_p, w2_p, b2_p)

        return out[:M, :d_model].reshape(B, S, d_model)

    forward_jit = jax.jit(forward)

    def apply(x):
        return forward_jit(x, w1_p, b1_p, w2_p, b2_p)

    return apply


def init_params(key, d_model, d_ff, dtype=jnp.float32):
    """Deterministic init mirroring torch.nn.Linear (uniform +-1/sqrt(fan_in))."""
    k1, k2, k3, k4 = jax.random.split(key, 4)
    bound1 = 1.0 / (d_model ** 0.5)
    bound2 = 1.0 / (d_ff ** 0.5)
    # stored as (in, out) so the kernel computes x @ W
    w1 = jax.random.uniform(k1, (d_model, d_ff), dtype, -bound1, bound1)
    b1 = jax.random.uniform(k2, (d_ff,), dtype, -bound1, bound1)
    w2 = jax.random.uniform(k3, (d_ff, d_model), dtype, -bound2, bound2)
    b2 = jax.random.uniform(k4, (d_model,), dtype, -bound2, bound2)
    return w1, b1, w2, b2


if __name__ == "__main__":
    key = jax.random.PRNGKey(0)
    kx, kp = jax.random.split(key)

    B, S, d_model, d_ff, dropout_p = 2, 8, 32, 64, 0.1
    x = jax.random.normal(kx, (B, S, d_model), jnp.float32)
    w1, b1, w2, b2 = init_params(kp, d_model, d_ff)

    # Reference in plain JAX (f32). Kernel uses bf16 MXU operands (and bf16 h
    # on v6e/v7x) with f32 accumulation -> bf16-appropriate tolerance.
    y_ref = jnp.maximum(x @ w1 + b1, 0.0) @ w2 + b2

    # Resident-weights fast path (weights easily fit VMEM at these sizes).
    ffn = make_ffn(w1, b1, w2, b2, dropout=dropout_p)
    y = jax.block_until_ready(ffn(x))
    assert y.shape == (B, S, d_model)
    assert jnp.allclose(y, y_ref, atol=5e-2, rtol=5e-2), float(
        jnp.max(jnp.abs(y - y_ref)))

    # Also exercise the tiled (d_ff-blocked, accumulator) fallback path.
    ffn_tiled = make_ffn(w1, b1, w2, b2, dropout=dropout_p, force_tiled=True)
    y2 = jax.block_until_ready(ffn_tiled(x))
    assert jnp.allclose(y2, y_ref, atol=5e-2, rtol=5e-2), float(
        jnp.max(jnp.abs(y2 - y_ref)))

    print("KERNEL_OK")
</pallas_src>

<mosaic_0001>
module attributes {stable_mosaic.version = 11 : i64} {
  func.func @_ffn_resident_kernel(%arg0: i32, %arg1: memref<16x128xbf16, #tpu.memory_space<vmem>>, %arg2: memref<128x128xbf16, #tpu.memory_space<vmem>>, %arg3: memref<1x128xf32, #tpu.memory_space<vmem>>, %arg4: memref<128x128xbf16, #tpu.memory_space<vmem>>, %arg5: memref<1x128xf32, #tpu.memory_space<vmem>>, %arg6: memref<16x128xf32, #tpu.memory_space<vmem>>) attributes {dimension_semantics = [#tpu.dimension_semantics<parallel>], iteration_bounds = array<i64: 1>, scalar_prefetch = 0 : i64, scratch_operands = 0 : i64, tpu.core_type = #tpu.core_type<tc>, window_params = [{transform_indices = @transform_0, window_bounds = array<i64: 16, 128>}, {pipeline_mode = #tpu.pipeline_mode<synchronous>, transform_indices = @transform_1, window_bounds = array<i64: 128, 128>}, {pipeline_mode = #tpu.pipeline_mode<synchronous>, transform_indices = @transform_2, window_bounds = array<i64: 1, 128>}, {pipeline_mode = #tpu.pipeline_mode<synchronous>, transform_indices = @transform_3, window_bounds = array<i64: 128, 128>}, {pipeline_mode = #tpu.pipeline_mode<synchronous>, transform_indices = @transform_4, window_bounds = array<i64: 1, 128>}, {transform_indices = @transform_5, window_bounds = array<i64: 16, 128>}]} {
    %c0 = arith.constant 0 : index
    %c0_0 = arith.constant 0 : index
    %0 = vector.load %arg1[%c0, %c0_0] : memref<16x128xbf16, #tpu.memory_space<vmem>>, vector<16x128xbf16>
    %c0_1 = arith.constant 0 : index
    %c0_2 = arith.constant 0 : index
    %1 = vector.load %arg2[%c0_1, %c0_2] : memref<128x128xbf16, #tpu.memory_space<vmem>>, vector<128x128xbf16>
    %cst = arith.constant dense<0.000000e+00> : vector<16x128xf32>
    %2 = tpu.matmul %0, %1, %cst {dimension_numbers = #tpu.dot_dimension_numbers<[1], [0], [0], [1], [0, 0, 1, 1], [], []>} : vector<16x128xbf16>, vector<128x128xbf16>, vector<16x128xf32> -> vector<16x128xf32>
    %c0_3 = arith.constant 0 : index
    %c0_4 = arith.constant 0 : index
    %3 = vector.load %arg3[%c0_3, %c0_4] : memref<1x128xf32, #tpu.memory_space<vmem>>, vector<1x128xf32>
    %4 = vector.broadcast %3 : vector<1x128xf32> to vector<16x128xf32>
    %5 = arith.addf %2, %4 : vector<16x128xf32>
    %cst_5 = arith.constant 0.000000e+00 : f32
    %6 = vector.broadcast %cst_5 : f32 to vector<16x128xf32>
    %7 = arith.maximumf %5, %6 : vector<16x128xf32>
    %8 = arith.truncf %7 : vector<16x128xf32> to vector<16x128xbf16>
    %c0_6 = arith.constant 0 : index
    %c0_7 = arith.constant 0 : index
    %9 = vector.load %arg4[%c0_6, %c0_7] : memref<128x128xbf16, #tpu.memory_space<vmem>>, vector<128x128xbf16>
    %cst_8 = arith.constant dense<0.000000e+00> : vector<16x128xf32>
    %10 = tpu.matmul %8, %9, %cst_8 {dimension_numbers = #tpu.dot_dimension_numbers<[1], [0], [0], [1], [0, 0, 1, 1], [], []>} : vector<16x128xbf16>, vector<128x128xbf16>, vector<16x128xf32> -> vector<16x128xf32>
    %c0_9 = arith.constant 0 : index
    %c0_10 = arith.constant 0 : index
    %11 = vector.load %arg5[%c0_9, %c0_10] : memref<1x128xf32, #tpu.memory_space<vmem>>, vector<1x128xf32>
    %12 = vector.broadcast %11 : vector<1x128xf32> to vector<16x128xf32>
    %13 = arith.addf %10, %12 : vector<16x128xf32>
    %c0_11 = arith.constant 0 : index
    %c0_12 = arith.constant 0 : index
    %14 = vector.load %arg6[%c0_11, %c0_12] : memref<16x128xf32, #tpu.memory_space<vmem>>, vector<16x128xf32>
    tpu.vector_store %arg6[%c0_11, %c0_12], %13 {strides = array<i32>} : memref<16x128xf32, #tpu.memory_space<vmem>>, vector<16x128xf32>,
    return
  }
  func.func @transform_0(%arg0: i32) -> (i32, i32) {
    %c0_i32 = arith.constant 0 : i32
    %c0_i32_0 = arith.constant 0 : i32
    return %arg0, %c0_i32 : i32, i32
  }
  func.func @transform_1(%arg0: i32) -> (i32, i32) {
    %c0_i32 = arith.constant 0 : i32
    %c0_i32_0 = arith.constant 0 : i32
    %c0_i32_1 = arith.constant 0 : i32
    return %c0_i32, %c0_i32_0 : i32, i32
  }
  func.func @transform_2(%arg0: i32) -> (i32, i32) {
    %c0_i32 = arith.constant 0 : i32
    %c0_i32_0 = arith.constant 0 : i32
    %c0_i32_1 = arith.constant 0 : i32
    return %c0_i32, %c0_i32_0 : i32, i32
  }
  func.func @transform_3(%arg0: i32) -> (i32, i32) {
    %c0_i32 = arith.constant 0 : i32
    %c0_i32_0 = arith.constant 0 : i32
    %c0_i32_1 = arith.constant 0 : i32
    return %c0_i32, %c0_i32_0 : i32, i32
  }
  func.func @transform_4(%arg0: i32) -> (i32, i32) {
    %c0_i32 = arith.constant 0 : i32
    %c0_i32_0 = arith.constant 0 : i32
    %c0_i32_1 = arith.constant 0 : i32
    return %c0_i32, %c0_i32_0 : i32, i32
  }
  func.func @transform_5(%arg0: i32) -> (i32, i32) {
    %c0_i32 = arith.constant 0 : i32
    %c0_i32_0 = arith.constant 0 : i32
    return %arg0, %c0_i32 : i32, i32
  }
}

</mosaic_0001>

<llo_original>
// kernel: forward.1
$region0: #{forward.1}
  #allocation0 [shape = 'u32[]', space=smem, size = 0x4, offset = 0x4, fixed_abs, tag = 'smem constant byte address 0x4 - core index']
  #allocation1 [shape = 'u32[144,128]{1,0:T(1,128)}', space=vmem, size = 0x12000, scoped, tag = 'internal scratch']
  %s0 = inlined_call_operand.vmem [shape: bf16[16,128], index: 0, kind: input, shape index: {}]
  %s1 = inlined_call_operand.hbm [shape: bf16[128,128], index: 1, kind: input, shape index: {}]
  %s2 = inlined_call_operand.vmem [shape: f32[1,128], index: 2, kind: input, shape index: {}]
  %s3 = inlined_call_operand.hbm [shape: bf16[128,128], index: 3, kind: input, shape index: {}]
  %s4 = inlined_call_operand.vmem [shape: f32[1,128], index: 4, kind: input, shape index: {}]
  %s5 = inlined_call_operand.vmem [shape: f32[16,128], index: 5, kind: output, shape index: {}]
  %s6 = sld [smem:[#allocation0]]
  $region38: #{forward.1} parent=0
    _
  %s8 = ssub.s32 1, %s6
  %s9 = scalar_select 0, %s8, %s6
  $region1: #{forward.1} parent=0
    #allocation2 [shape = 'u8[32768]{0}', space=vmem, size = 0x8000, scoped, tag = 'input window, operand 1, single buffered']
    #allocation3 [shape = 's32[1]{0}', space=sflag, size = 0x4, scoped, tag = 'scoped memory for forward.1']
    #allocation4 [shape = 'u8[32768]{0}', space=vmem, size = 0x8000, scoped, tag = 'input window, operand 3, single buffered']
    #allocation5 [shape = 's32[1]{0}', space=sflag, size = 0x4, scoped, tag = 'scoped memory for forward.1']
    %10 = vsyncpa [#allocation3], 0
    %11 = vsyncpa [#allocation5], 0
    // Predicated region
    $region2: #{forward.1} parent=1 // pred_check
      _
    $region3: #{forward.1} parent=1 // pred_check_branch
      %13 = sbr.rel (0) target = $region5
    $region4: #{forward.1} parent=1 // pred_region
      _
    $region5: #{forward.1} parent=1 // pred_fallthru
      _
    // Predicated region
    $region6: #{forward.1} parent=1 // pred_check
      _
    $region7: #{forward.1} parent=1 // pred_check_branch
      %15 = sbr.rel (0) target = $region9
    $region8: #{forward.1} parent=1 // pred_region
      %s17 = ssub.s32 1024, 1024
      %18 = vsyncadd [#allocation3], %s17
      %s19 = sshll.u32 [#allocation2], 4
      %s20 = int_to_ptr.vmem [resolvable:$true] %s19
      %25 = dma.hbm_to_vmem [thread:$0]  %s1, 1024, %s20, [#allocation3], 64, 64, 4
    $region9: #{forward.1} parent=1 // pred_fallthru
      _
    // Predicated region
    $region10: #{forward.1} parent=1 // pred_check
      _
    $region11: #{forward.1} parent=1 // pred_check_branch
      %27 = sbr.rel (0) target = $region13
    $region12: #{forward.1} parent=1 // pred_region
      _
    $region13: #{forward.1} parent=1 // pred_fallthru
      _
    // Predicated region
    $region14: #{forward.1} parent=1 // pred_check
      _
    $region15: #{forward.1} parent=1 // pred_check_branch
      %29 = sbr.rel (0) target = $region17
    $region16: #{forward.1} parent=1 // pred_region
      %s31 = ssub.s32 1024, 1024
      %32 = vsyncadd [#allocation5], %s31
      %s33 = sshll.u32 [#allocation4], 4
      %s34 = int_to_ptr.vmem [resolvable:$true] %s33
      %39 = dma.hbm_to_vmem [thread:$0]  %s3, 1024, %s34, [#allocation5], 64, 64, 4
    $region17: #{forward.1} parent=1 // pred_fallthru
      _
    // Predicated region
    $region18: #{forward.1} parent=1 // pred_check
      _
    $region19: #{forward.1} parent=1 // pred_check_branch
      %41 = sbr.rel (0) target = $region21
    $region20: #{forward.1} parent=1 // pred_region
      _
    $region21: #{forward.1} parent=1 // pred_fallthru
      _
    // Predicated region
    $region22: #{forward.1} parent=1 // pred_check
      _
    $region23: #{forward.1} parent=1 // pred_check_branch
      %43 = sbr.rel (0) target = $region25
    $region24: #{forward.1} parent=1 // pred_region
      %44 = dma.done [#allocation3], 1024
    $region25: #{forward.1} parent=1 // pred_fallthru
      _
    // Predicated region
    $region26: #{forward.1} parent=1 // pred_check
      _
    $region27: #{forward.1} parent=1 // pred_check_branch
      %46 = sbr.rel (0) target = $region29
    $region28: #{forward.1} parent=1 // pred_region
      %47 = dma.done [#allocation5], 1024
    $region29: #{forward.1} parent=1 // pred_fallthru
      _
    %v49 = vld [vmem:[%s0] sm:$0xf]
    %v50 = vld [vmem:[%s0 + $0x4] sm:$0xf]
    %v51 = vld [vmem:[#allocation2] sm:$0xf]
    %v52 = vld [vmem:[#allocation2 + $0x4] sm:$0xf]
    %v53 = vld [vmem:[#allocation2 + $0x8] sm:$0xf]
    %v54 = vld [vmem:[#allocation2 + $0xc] sm:$0xf]
    %v55 = vld [vmem:[#allocation2 + $0x10] sm:$0xf]
    %v56 = vld [vmem:[#allocation2 + $0x14] sm:$0xf]
    %v57 = vld [vmem:[#allocation2 + $0x18] sm:$0xf]
    %v58 = vld [vmem:[#allocation2 + $0x1c] sm:$0xf]
    %v59 = vld [vmem:[#allocation2 + $0x20] sm:$0xf]
    %v60 = vld [vmem:[#allocation2 + $0x24] sm:$0xf]
    %v61 = vld [vmem:[#allocation2 + $0x28] sm:$0xf]
    %v62 = vld [vmem:[#allocation2 + $0x2c] sm:$0xf]
    %v63 = vld [vmem:[#allocation2 + $0x30] sm:$0xf]
    %v64 = vld [vmem:[#allocation2 + $0x34] sm:$0xf]
    %v65 = vld [vmem:[#allocation2 + $0x38] sm:$0xf]
    %v66 = vld [vmem:[#allocation2 + $0x3c] sm:$0xf]
    %v67 = vld [vmem:[%s2] sm:$0x1]
    %v69 = vlaneseq
    %v70 = vshrl.u32 %v69, 7
    %v71 = vsub.s32 0, %v70
    %v72 = vrot.slane %v67, %v71
    %v76 = vunpack.c.l.b16 %v49
    %v77 = vunpack.c.l.b16 %v50
    %v78 = vpack.c.b16 %v77, %v76
    %v96 = vunpack.c.l.b16 %v51
    %v97 = vunpack.c.l.b16 %v52
    %v98 = vunpack.c.l.b16 %v53
    %v99 = vunpack.c.l.b16 %v54
    %v100 = vunpack.c.l.b16 %v55
    %v101 = vunpack.c.l.b16 %v56
    %v102 = vunpack.c.l.b16 %v57
    %v103 = vunpack.c.l.b16 %v58
    %v104 = vunpack.c.l.b16 %v59
    %v105 = vunpack.c.l.b16 %v60
    %v106 = vunpack.c.l.b16 %v61
    %v107 = vunpack.c.l.b16 %v62
    %v108 = vunpack.c.l.b16 %v63
    %v109 = vunpack.c.l.b16 %v64
    %v110 = vunpack.c.l.b16 %v65
    %v111 = vunpack.c.l.b16 %v66
    %v112 = vpack.c.b16 %v97, %v96
    %v113 = vpack.c.b16 %v99, %v98
    %v114 = vpack.c.b16 %v101, %v100
    %v115 = vpack.c.b16 %v103, %v102
    %v116 = vpack.c.b16 %v105, %v104
    %v117 = vpack.c.b16 %v107, %v106
    %v118 = vpack.c.b16 %v109, %v108
    %v119 = vpack.c.b16 %v111, %v110
    %128 = vmatprep.subr.bf16.mxu0 0
    %129 = vmatpush1.bf16.msra.mxu0 %v119
    %130 = vmatprep.subr.bf16.mxu0 0
    %131 = vmatpush1.bf16.msra.mxu0 %v118
    %132 = vmatprep.subr.bf16.mxu0 0
    %133 = vmatpush1.bf16.msra.mxu0 %v117
    %134 = vmatprep.subr.bf16.mxu0 0
    %135 = vmatpush1.bf16.msra.mxu0 %v116
    %136 = vmatprep.subr.bf16.mxu0 0
    %137 = vmatpush1.bf16.msra.mxu0 %v115
    %138 = vmatprep.subr.bf16.mxu0 0
    %139 = vmatpush1.bf16.msra.mxu0 %v114
    %140 = vmatprep.subr.bf16.mxu0 0
    %141 = vmatpush1.bf16.msra.mxu0 %v113
    %142 = vmatprep.subr.bf16.mxu0 0
    %143 = vmatpush1.bf16.msra.mxu0 %v112
    %144 = vmatprep.subr.bf16.mxu0 0
    %145 = vmatpush2.bf16.msra.mxu0 0
    %146 = vmatprep.subr.bf16.mxu0 0
    %147 = vmatpush2.bf16.msra.mxu0 0
    %148 = vmatprep.subr.bf16.mxu0 0
    %149 = vmatpush2.bf16.msra.mxu0 0
    %150 = vmatprep.subr.bf16.mxu0 0
    %151 = vmatpush2.bf16.msra.mxu0 0
    %152 = vmatprep.subr.bf16.mxu0 0
    %153 = vmatpush2.bf16.msra.mxu0 0
    %154 = vmatprep.subr.bf16.mxu0 0
    %155 = vmatpush2.bf16.msra.mxu0 0
    %156 = vmatprep.subr.bf16.mxu0 0
    %157 = vmatpush2.bf16.msra.mxu0 0
    %158 = vmatprep.subr.bf16.mxu0 0
    %159 = vmatpush2.bf16.msra.mxu0 0
    %160 = vmatprep.mubr.bf16.mxu0 0
    %161 = vmatmul.mubr.bf16.gmra.mxu0 %v78
    %v162 = vpop.f32.mrf.mxu0
    %v163 = vadd.f32 %v72, %v162
    %v164 = vpop.f32.mrf.mxu0
    %v165 = vpop.f32.mrf.mxu0
    %v166 = vadd.f32 %v72, %v165
    %v167 = vpop.f32.mrf.mxu0
    %168 = vdwg.mxu0
    %v169 = vmax.f32 %v163, 0.0
    %v170 = vmax.f32 %v166, 0.0
    %v171 = vpack.c.bf16 %v170, %v169
    %v172 = vld [vmem:[#allocation4] sm:$0xf]
    %v173 = vld [vmem:[#allocation4 + $0x4] sm:$0xf]
    %v174 = vld [vmem:[#allocation4 + $0x8] sm:$0xf]
    %v175 = vld [vmem:[#allocation4 + $0xc] sm:$0xf]
    %v176 = vld [vmem:[#allocation4 + $0x10] sm:$0xf]
    %v177 = vld [vmem:[#allocation4 + $0x14] sm:$0xf]
    %v178 = vld [vmem:[#allocation4 + $0x18] sm:$0xf]
    %v179 = vld [vmem:[#allocation4 + $0x1c] sm:$0xf]
    %v180 = vld [vmem:[#allocation4 + $0x20] sm:$0xf]
    %v181 = vld [vmem:[#allocation4 + $0x24] sm:$0xf]
    %v182 = vld [vmem:[#allocation4 + $0x28] sm:$0xf]
    %v183 = vld [vmem:[#allocation4 + $0x2c] sm:$0xf]
    %v184 = vld [vmem:[#allocation4 + $0x30] sm:$0xf]
    %v185 = vld [vmem:[#allocation4 + $0x34] sm:$0xf]
    %v186 = vld [vmem:[#allocation4 + $0x38] sm:$0xf]
    %v187 = vld [vmem:[#allocation4 + $0x3c] sm:$0xf]
    %v188 = vld [vmem:[%s4] sm:$0x1]
    %v190 = vlaneseq
    %v191 = vshrl.u32 %v190, 7
    %v192 = vsub.s32 0, %v191
    %v193 = vrot.slane %v188, %v192
    %v211 = vunpack.c.l.b16 %v172
    %v212 = vunpack.c.l.b16 %v173
    %v213 = vunpack.c.l.b16 %v174
    %v214 = vunpack.c.l.b16 %v175
    %v215 = vunpack.c.l.b16 %v176
    %v216 = vunpack.c.l.b16 %v177
    %v217 = vunpack.c.l.b16 %v178
    %v218 = vunpack.c.l.b16 %v179
    %v219 = vunpack.c.l.b16 %v180
    %v220 = vunpack.c.l.b16 %v181
    %v221 = vunpack.c.l.b16 %v182
    %v222 = vunpack.c.l.b16 %v183
    %v223 = vunpack.c.l.b16 %v184
    %v224 = vunpack.c.l.b16 %v185
    %v225 = vunpack.c.l.b16 %v186
    %v226 = vunpack.c.l.b16 %v187
    %v227 = vpack.c.b16 %v212, %v211
    %v228 = vpack.c.b16 %v214, %v213
    %v229 = vpack.c.b16 %v216, %v215
    %v230 = vpack.c.b16 %v218, %v217
    %v231 = vpack.c.b16 %v220, %v219
    %v232 = vpack.c.b16 %v222, %v221
    %v233 = vpack.c.b16 %v224, %v223
    %v234 = vpack.c.b16 %v226, %v225
    %243 = vmatprep.subr.bf16.mxu0 0
    %244 = vmatpush1.bf16.msra.mxu0 %v234
    %245 = vmatprep.subr.bf16.mxu0 0
    %246 = vmatpush1.bf16.msra.mxu0 %v233
    %247 = vmatprep.subr.bf16.mxu0 0
    %248 = vmatpush1.bf16.msra.mxu0 %v232
    %249 = vmatprep.subr.bf16.mxu0 0
    %250 = vmatpush1.bf16.msra.mxu0 %v231
    %251 = vmatprep.subr.bf16.mxu0 0
    %252 = vmatpush1.bf16.msra.mxu0 %v230
    %253 = vmatprep.subr.bf16.mxu0 0
    %254 = vmatpush1.bf16.msra.mxu0 %v229
    %255 = vmatprep.subr.bf16.mxu0 0
    %256 = vmatpush1.bf16.msra.mxu0 %v228
    %257 = vmatprep.subr.bf16.mxu0 0
    %258 = vmatpush1.bf16.msra.mxu0 %v227
    %259 = vmatprep.subr.bf16.mxu0 0
    %260 = vmatpush2.bf16.msra.mxu0 0
    %261 = vmatprep.subr.bf16.mxu0 0
    %262 = vmatpush2.bf16.msra.mxu0 0
    %263 = vmatprep.subr.bf16.mxu0 0
    %264 = vmatpush2.bf16.msra.mxu0 0
    %265 = vmatprep.subr.bf16.mxu0 0
    %266 = vmatpush2.bf16.msra.mxu0 0
    %267 = vmatprep.subr.bf16.mxu0 0
    %268 = vmatpush2.bf16.msra.mxu0 0
    %269 = vmatprep.subr.bf16.mxu0 0
    %270 = vmatpush2.bf16.msra.mxu0 0
    %271 = vmatprep.subr.bf16.mxu0 0
    %272 = vmatpush2.bf16.msra.mxu0 0
    %273 = vmatprep.subr.bf16.mxu0 0
    %274 = vmatpush2.bf16.msra.mxu0 0
    %275 = vmatprep.mubr.bf16.mxu0 0
    %276 = vmatmul.mubr.bf16.gmra.mxu0 %v171
    %v277 = vpop.f32.mrf.mxu0
    %v278 = vadd.f32 %v193, %v277
    %v279 = vpop.f32.mrf.mxu0
    %v280 = vpop.f32.mrf.mxu0
    %v281 = vadd.f32 %v193, %v280
    %v282 = vpop.f32.mrf.mxu0
    %283 = vdwg.mxu0
    %284 = vst [vmem:[%s5] sm:$0xff] %v278
    %285 = vst [vmem:[%s5 + $0x8] sm:$0xff] %v281
    // Predicated region
    $region30: #{forward.1} parent=1 // pred_check
      _
    $region31: #{forward.1} parent=1 // pred_check_branch
      %287 = sbr.rel (0) target = $region33
    $region32: #{forward.1} parent=1 // pred_region
      _
    $region33: #{forward.1} parent=1 // pred_fallthru
      _
    // Predicated region
    $region34: #{forward.1} parent=1 // pred_check
      _
    $region35: #{forward.1} parent=1 // pred_check_branch
      %289 = sbr.rel (0) target = $region37
    $region36: #{forward.1} parent=1 // pred_region
      _
    $region37: #{forward.1} parent=1 // pred_fallthru
      _
    %290 = vsyncpa [#allocation3], 1
    %291 = vsyncpa [#allocation5], 1

</llo_original>
